<compile_context>
chip_gen: v5e
topology: v5e:2x2
jax: 0.10.0
libtpu: 0.0.40
codegen_flags: <defaults>
</compile_context>

<pallas_src>
import jax
import jax.numpy as jnp
from jax.experimental import pallas as pl
from jax.experimental.pallas import tpu as pltpu


def _round_up(x, m):
    return ((x + m - 1) // m) * m


def _choose_batch_tile(B, block_b):
    """Batch tile: multiple of 16 (bf16-native sublanes), capped by block_b,
    and capped near B/2 so the grid has >=2 'parallel' steps (v7x megacore)."""
    if B <= 16:
        return _round_up(B, 8)
    tb = min(block_b, _round_up(B, 16))
    half = _round_up(-(-B // 2), 16)
    return max(min(tb, half), 16)


def _make_singlenet_kernel(n_heads):
    def kernel(*refs):
        vec_ref, w1_ref, b1_ref = refs[:3]
        head_refs = refs[3:3 + 2 * n_heads]
        out_refs = refs[3 + 2 * n_heads:]
        # fc1: bf16 operands on the MXU, f32 accumulate, f32 bias + ReLU.
        v = vec_ref[...].astype(jnp.bfloat16)          # cast on-chip (VPU)
        h = jnp.dot(v, w1_ref[...], preferred_element_type=jnp.float32)
        h = jnp.maximum(h + b1_ref[...], 0.0).astype(jnp.bfloat16)
        # Heads: each head writes its own (tb, od) output ref directly, so the
        # kernel writes only real data (no padded slab, no split pass outside).
        for k in range(n_heads):
            w2_ref, b2_ref = head_refs[2 * k], head_refs[2 * k + 1]
            o = jnp.dot(h, w2_ref[...], preferred_element_type=jnp.float32)
            out_refs[k][...] = (o + b2_ref[...]).astype(out_refs[k].dtype)
    return kernel


def prepare_singlenet_params(params):
    """One-time weight prep (hoisted out of the per-call forward path).

    * W1 cast to bf16, hidden (vec_dim) axis zero-padded to a multiple of 128.
    * Each head's W2 cast to bf16 with its K (hidden) axis zero-padded to
      match; padded hidden lanes are exactly 0 after ReLU, so results are
      bit-identical to the unpadded math.
    """
    w1, b1, heads = params["w1"], params["b1"], params["heads"]
    din, dvec = w1.shape
    dvec_p = _round_up(dvec, 128)

    w1_p = jnp.zeros((din, dvec_p), jnp.bfloat16).at[:, :dvec].set(
        w1.astype(jnp.bfloat16))
    b1_p = jnp.zeros((1, dvec_p), jnp.float32).at[:, :dvec].set(
        b1.astype(jnp.float32))

    heads_p = []
    for wk, bk in heads:
        od = wk.shape[1]
        wk_p = jnp.zeros((dvec_p, od), jnp.bfloat16).at[:dvec, :].set(
            wk.astype(jnp.bfloat16))
        heads_p.append((wk_p, bk.astype(jnp.float32)))

    return {
        "w1": w1_p, "b1": b1_p, "heads": heads_p,
        "din": din, "dvec": dvec, "dvec_p": dvec_p,
        "out_dims": tuple(wk.shape[1] for (wk, _) in heads),
    }


def singlenet_forward(img, tag, vec, prepared, *, block_b=2048):
    """Fused SingleNet forward. img/tag are unused (as in the PyTorch module)."""
    del img, tag

    B, din = vec.shape
    assert din == prepared["din"]
    dvec_p = prepared["dvec_p"]
    out_dims = prepared["out_dims"]
    n_heads = len(out_dims)
    dout = sum(out_dims)

    tb = _choose_batch_tile(B, block_b)
    grid = (pl.cdiv(B, tb),)

    head_args, head_specs = [], []
    for wk_p, bk in prepared["heads"]:
        od = wk_p.shape[1]
        head_args += [wk_p, bk]
        head_specs += [pl.BlockSpec((dvec_p, od), lambda i: (0, 0)),  # W2_k resident
                       pl.BlockSpec((1, od), lambda i: (0, 0))]       # b2_k resident

    out_shape = tuple(jax.ShapeDtypeStruct((B, od), jnp.float32) for od in out_dims)
    out_specs = tuple(pl.BlockSpec((tb, od), lambda i: (i, 0)) for od in out_dims)

    # Advisory cost hint so XLA can overlap surrounding ops with this call.
    flops = 2 * B * (din * dvec_p + dvec_p * dout)
    bytes_accessed = (B * din * 4                          # vec (f32, streamed)
                      + din * dvec_p * 2 + dvec_p * 4      # W1 / b1 (resident)
                      + sum(dvec_p * od * 2 + od * 4 for od in out_dims)
                      + B * dout * 4)                      # per-head outputs
    cost = pl.CostEstimate(flops=flops, transcendentals=0,
                           bytes_accessed=bytes_accessed)

    outs = pl.pallas_call(
        _make_singlenet_kernel(n_heads),
        out_shape=out_shape,
        grid=grid,
        in_specs=[
            pl.BlockSpec((tb, din), lambda i: (i, 0)),      # vec tile (ragged last block OK)
            pl.BlockSpec((din, dvec_p), lambda i: (0, 0)),  # W1 (resident)
            pl.BlockSpec((1, dvec_p), lambda i: (0, 0)),    # b1 (resident)
        ] + head_specs,
        out_specs=out_specs,
        compiler_params=pltpu.CompilerParams(
            dimension_semantics=("parallel",),
            vmem_limit_bytes=32 * 1024 * 1024,
        ),
        cost_estimate=cost,
    )(vec, prepared["w1"], prepared["b1"], *head_args)

    return list(outs)


def init_singlenet_params(key, input_dim, vec_dim, out_dims):
    """Deterministic synthetic init (uniform ~ PyTorch Linear default scale)."""
    keys = jax.random.split(key, 2 + 2 * len(out_dims))
    s1 = 1.0 / jnp.sqrt(jnp.float32(input_dim))
    w1 = jax.random.uniform(keys[0], (input_dim, vec_dim), jnp.float32, -s1, s1)
    b1 = jax.random.uniform(keys[1], (1, vec_dim), jnp.float32, -s1, s1)
    heads = []
    s2 = 1.0 / jnp.sqrt(jnp.float32(vec_dim))
    for i, od in enumerate(out_dims):
        wk = jax.random.uniform(keys[2 + 2 * i], (vec_dim, od), jnp.float32, -s2, s2)
        bk = jax.random.uniform(keys[3 + 2 * i], (1, od), jnp.float32, -s2, s2)
        heads.append((wk, bk))
    return {"w1": w1, "b1": b1, "heads": heads}


def singlenet_reference_f32(vec, params):
    h = jnp.maximum(vec @ params["w1"] + params["b1"], 0.0)
    return [h @ wk + bk for (wk, bk) in params["heads"]]


def singlenet_reference_bf16(vec, params):
    """Same bf16 operand / f32 accumulate recipe as the kernel."""
    v = vec.astype(jnp.bfloat16)
    w1 = params["w1"].astype(jnp.bfloat16)
    h = jnp.maximum(
        jnp.dot(v, w1, preferred_element_type=jnp.float32) + params["b1"], 0.0)
    hb = h.astype(jnp.bfloat16)
    return [
        jnp.dot(hb, wk.astype(jnp.bfloat16),
                preferred_element_type=jnp.float32) + bk
        for (wk, bk) in params["heads"]
    ]


if __name__ == "__main__":
    B, INPUT_DIM, VEC_DIM = 8, 32, 64
    OUT_DIMS = (16, 8)

    key = jax.random.PRNGKey(0)
    k_params, k_img, k_tag, k_vec = jax.random.split(key, 4)

    params = init_singlenet_params(k_params, INPUT_DIM, VEC_DIM, OUT_DIMS)
    prepared = prepare_singlenet_params(params)   # one-time weight prep (hoisted)

    # img / tag are unused by the forward pass (kept for signature parity).
    img = jax.random.normal(k_img, (B, 3, 16, 16), jnp.float32)
    tag = jax.random.normal(k_tag, (B, 4), jnp.float32)
    vec = jax.random.normal(k_vec, (B, INPUT_DIM), jnp.float32)

    outs = singlenet_forward(img, tag, vec, prepared)
    outs = [jax.block_until_ready(o) for o in outs]

    refs_f32 = singlenet_reference_f32(vec, params)
    refs_bf16 = singlenet_reference_bf16(vec, params)
    for o, rf, rb, od in zip(outs, refs_f32, refs_bf16, OUT_DIMS):
        assert o.shape == (B, od), (o.shape, (B, od))
        # Tight check vs a reference using the same bf16 operand recipe.
        assert jnp.allclose(o, rb, atol=1e-3, rtol=1e-3), "mismatch vs bf16 ref"
        # Loose check vs the pure-f32 reference (bf16 operand rounding only).
        assert jnp.allclose(o, rf, atol=5e-2, rtol=5e-2), "mismatch vs f32 ref"

    print("KERNEL_OK")
</pallas_src>

<mosaic_0001>
module attributes {stable_mosaic.version = 11 : i64} {
  func.func @kernel(%arg0: i32, %arg1: memref<8x32xf32, #tpu.memory_space<vmem>>, %arg2: memref<32x128xbf16, #tpu.memory_space<vmem>>, %arg3: memref<1x128xf32, #tpu.memory_space<vmem>>, %arg4: memref<128x16xbf16, #tpu.memory_space<vmem>>, %arg5: memref<1x16xf32, #tpu.memory_space<vmem>>, %arg6: memref<128x8xbf16, #tpu.memory_space<vmem>>, %arg7: memref<1x8xf32, #tpu.memory_space<vmem>>, %arg8: memref<8x16xf32, #tpu.memory_space<vmem>>, %arg9: memref<8x8xf32, #tpu.memory_space<vmem>>) attributes {dimension_semantics = [#tpu.dimension_semantics<parallel>], iteration_bounds = array<i64: 1>, scalar_prefetch = 0 : i64, scratch_operands = 0 : i64, tpu.core_type = #tpu.core_type<tc>, window_params = [{transform_indices = @transform_0, window_bounds = array<i64: 8, 32>}, {pipeline_mode = #tpu.pipeline_mode<synchronous>, transform_indices = @transform_1, window_bounds = array<i64: 32, 128>}, {pipeline_mode = #tpu.pipeline_mode<synchronous>, transform_indices = @transform_2, window_bounds = array<i64: 1, 128>}, {pipeline_mode = #tpu.pipeline_mode<synchronous>, transform_indices = @transform_3, window_bounds = array<i64: 128, 16>}, {pipeline_mode = #tpu.pipeline_mode<synchronous>, transform_indices = @transform_4, window_bounds = array<i64: 1, 16>}, {pipeline_mode = #tpu.pipeline_mode<synchronous>, transform_indices = @transform_5, window_bounds = array<i64: 128, 8>}, {pipeline_mode = #tpu.pipeline_mode<synchronous>, transform_indices = @transform_6, window_bounds = array<i64: 1, 8>}, {transform_indices = @transform_7, window_bounds = array<i64: 8, 16>}, {transform_indices = @transform_8, window_bounds = array<i64: 8, 8>}]} {
    %c0 = arith.constant 0 : index
    %c0_0 = arith.constant 0 : index
    %0 = vector.load %arg1[%c0, %c0_0] : memref<8x32xf32, #tpu.memory_space<vmem>>, vector<8x32xf32>
    %1 = arith.truncf %0 : vector<8x32xf32> to vector<8x32xbf16>
    %c0_1 = arith.constant 0 : index
    %c0_2 = arith.constant 0 : index
    %2 = vector.load %arg2[%c0_1, %c0_2] : memref<32x128xbf16, #tpu.memory_space<vmem>>, vector<32x128xbf16>
    %cst = arith.constant dense<0.000000e+00> : vector<8x128xf32>
    %3 = tpu.matmul %1, %2, %cst {dimension_numbers = #tpu.dot_dimension_numbers<[1], [0], [0], [1], [0, 0, 1, 1], [], []>} : vector<8x32xbf16>, vector<32x128xbf16>, vector<8x128xf32> -> vector<8x128xf32>
    %c0_3 = arith.constant 0 : index
    %c0_4 = arith.constant 0 : index
    %4 = vector.load %arg3[%c0_3, %c0_4] : memref<1x128xf32, #tpu.memory_space<vmem>>, vector<1x128xf32>
    %5 = vector.broadcast %4 : vector<1x128xf32> to vector<8x128xf32>
    %6 = arith.addf %3, %5 : vector<8x128xf32>
    %cst_5 = arith.constant 0.000000e+00 : f32
    %7 = vector.broadcast %cst_5 : f32 to vector<8x128xf32>
    %8 = arith.maximumf %6, %7 : vector<8x128xf32>
    %9 = arith.truncf %8 : vector<8x128xf32> to vector<8x128xbf16>
    %c0_6 = arith.constant 0 : index
    %c0_7 = arith.constant 0 : index
    %10 = vector.load %arg4[%c0_6, %c0_7] : memref<128x16xbf16, #tpu.memory_space<vmem>>, vector<128x16xbf16>
    %cst_8 = arith.constant dense<0.000000e+00> : vector<8x16xf32>
    %11 = tpu.matmul %9, %10, %cst_8 {dimension_numbers = #tpu.dot_dimension_numbers<[1], [0], [0], [1], [0, 0, 1, 1], [], []>} : vector<8x128xbf16>, vector<128x16xbf16>, vector<8x16xf32> -> vector<8x16xf32>
    %c0_9 = arith.constant 0 : index
    %c0_10 = arith.constant 0 : index
    %12 = vector.load %arg5[%c0_9, %c0_10] : memref<1x16xf32, #tpu.memory_space<vmem>>, vector<1x16xf32>
    %13 = vector.broadcast %12 : vector<1x16xf32> to vector<8x16xf32>
    %14 = arith.addf %11, %13 : vector<8x16xf32>
    %c0_11 = arith.constant 0 : index
    %c0_12 = arith.constant 0 : index
    %15 = vector.load %arg8[%c0_11, %c0_12] : memref<8x16xf32, #tpu.memory_space<vmem>>, vector<8x16xf32>
    tpu.vector_store %arg8[%c0_11, %c0_12], %14 {strides = array<i32>} : memref<8x16xf32, #tpu.memory_space<vmem>>, vector<8x16xf32>,
    %c0_13 = arith.constant 0 : index
    %c0_14 = arith.constant 0 : index
    %16 = vector.load %arg6[%c0_13, %c0_14] : memref<128x8xbf16, #tpu.memory_space<vmem>>, vector<128x8xbf16>
    %cst_15 = arith.constant dense<0.000000e+00> : vector<8x8xf32>
    %17 = tpu.matmul %9, %16, %cst_15 {dimension_numbers = #tpu.dot_dimension_numbers<[1], [0], [0], [1], [0, 0, 1, 1], [], []>} : vector<8x128xbf16>, vector<128x8xbf16>, vector<8x8xf32> -> vector<8x8xf32>
    %c0_16 = arith.constant 0 : index
    %c0_17 = arith.constant 0 : index
    %18 = vector.load %arg7[%c0_16, %c0_17] : memref<1x8xf32, #tpu.memory_space<vmem>>, vector<1x8xf32>
    %19 = vector.broadcast %18 : vector<1x8xf32> to vector<8x8xf32>
    %20 = arith.addf %17, %19 : vector<8x8xf32>
    %c0_18 = arith.constant 0 : index
    %c0_19 = arith.constant 0 : index
    %21 = vector.load %arg9[%c0_18, %c0_19] : memref<8x8xf32, #tpu.memory_space<vmem>>, vector<8x8xf32>
    tpu.vector_store %arg9[%c0_18, %c0_19], %20 {strides = array<i32>} : memref<8x8xf32, #tpu.memory_space<vmem>>, vector<8x8xf32>,
    return
  }
  func.func @transform_0(%arg0: i32) -> (i32, i32) {
    %c0_i32 = arith.constant 0 : i32
    %c0_i32_0 = arith.constant 0 : i32
    return %arg0, %c0_i32 : i32, i32
  }
  func.func @transform_1(%arg0: i32) -> (i32, i32) {
    %c0_i32 = arith.constant 0 : i32
    %c0_i32_0 = arith.constant 0 : i32
    %c0_i32_1 = arith.constant 0 : i32
    return %c0_i32, %c0_i32_0 : i32, i32
  }
  func.func @transform_2(%arg0: i32) -> (i32, i32) {
    %c0_i32 = arith.constant 0 : i32
    %c0_i32_0 = arith.constant 0 : i32
    %c0_i32_1 = arith.constant 0 : i32
    return %c0_i32, %c0_i32_0 : i32, i32
  }
  func.func @transform_3(%arg0: i32) -> (i32, i32) {
    %c0_i32 = arith.constant 0 : i32
    %c0_i32_0 = arith.constant 0 : i32
    %c0_i32_1 = arith.constant 0 : i32
    return %c0_i32, %c0_i32_0 : i32, i32
  }
  func.func @transform_4(%arg0: i32) -> (i32, i32) {
    %c0_i32 = arith.constant 0 : i32
    %c0_i32_0 = arith.constant 0 : i32
    %c0_i32_1 = arith.constant 0 : i32
    return %c0_i32, %c0_i32_0 : i32, i32
  }
  func.func @transform_5(%arg0: i32) -> (i32, i32) {
    %c0_i32 = arith.constant 0 : i32
    %c0_i32_0 = arith.constant 0 : i32
    %c0_i32_1 = arith.constant 0 : i32
    return %c0_i32, %c0_i32_0 : i32, i32
  }
  func.func @transform_6(%arg0: i32) -> (i32, i32) {
    %c0_i32 = arith.constant 0 : i32
    %c0_i32_0 = arith.constant 0 : i32
    %c0_i32_1 = arith.constant 0 : i32
    return %c0_i32, %c0_i32_0 : i32, i32
  }
  func.func @transform_7(%arg0: i32) -> (i32, i32) {
    %c0_i32 = arith.constant 0 : i32
    %c0_i32_0 = arith.constant 0 : i32
    return %arg0, %c0_i32 : i32, i32
  }
  func.func @transform_8(%arg0: i32) -> (i32, i32) {
    %c0_i32 = arith.constant 0 : i32
    %c0_i32_0 = arith.constant 0 : i32
    return %arg0, %c0_i32 : i32, i32
  }
}

</mosaic_0001>

<llo_original>
// kernel: tpu_custom_call.1
$region0: #{tpu_custom_call.1}
  #allocation0 [shape = 'u32[]', space=smem, size = 0x4, offset = 0x4, fixed_abs, tag = 'smem constant byte address 0x4 - core index']
  #allocation1 [shape = 'u32[72,128]{1,0:T(1,128)}', space=vmem, size = 0x9000, scoped, tag = 'internal scratch']
  %s0 = inlined_call_operand.vmem [shape: f32[8,32], index: 0, kind: input, shape index: {}]
  %s1 = inlined_call_operand.vmem [shape: bf16[32,128], index: 1, kind: input, shape index: {}]
  %s2 = inlined_call_operand.vmem [shape: f32[1,128], index: 2, kind: input, shape index: {}]
  %s3 = inlined_call_operand.vmem [shape: bf16[128,16], index: 3, kind: input, shape index: {}]
  %s4 = inlined_call_operand.vmem [shape: f32[1,16], index: 4, kind: input, shape index: {}]
  %s5 = inlined_call_operand.vmem [shape: bf16[128,8], index: 5, kind: input, shape index: {}]
  %s6 = inlined_call_operand.vmem [shape: f32[1,8], index: 6, kind: input, shape index: {}]
  %s7 = inlined_call_operand.hbm [shape: f32[8,16], index: 7, kind: output, shape index: {0}]
  %s8 = inlined_call_operand.hbm [shape: f32[8,8], index: 8, kind: output, shape index: {1}]
  %9 = xla_tuple %s7, %s8
  %s10 = sld [smem:[#allocation0]]
  $region46: #{tpu_custom_call.1} parent=0
    _
  %s12 = ssub.s32 1, %s10
  %s13 = scalar_select 0, %s12, %s10
  $region1: #{tpu_custom_call.1} parent=0
    #allocation2 [shape = 'u8[4096]{0}', space=vmem, size = 0x1000, scoped, tag = 'output window, operand 0, single buffered']
    #allocation3 [shape = 's32[1]{0}', space=sflag, size = 0x4, scoped, tag = 'scoped memory for tpu_custom_call.1']
    #allocation4 [shape = 'u8[4096]{0}', space=vmem, size = 0x1000, scoped, tag = 'output window, operand 1, single buffered']
    #allocation5 [shape = 's32[1]{0}', space=sflag, size = 0x4, scoped, tag = 'scoped memory for tpu_custom_call.1']
    %14 = vsyncpa [#allocation3], 0
    %15 = vsyncpa [#allocation5], 0
    // Predicated region
    $region2: #{tpu_custom_call.1} parent=1 // pred_check
      _
    $region3: #{tpu_custom_call.1} parent=1 // pred_check_branch
      %17 = sbr.rel (0) target = $region5
    $region4: #{tpu_custom_call.1} parent=1 // pred_region
      _
    $region5: #{tpu_custom_call.1} parent=1 // pred_fallthru
      _
    // Predicated region
    $region6: #{tpu_custom_call.1} parent=1 // pred_check
      _
    $region7: #{tpu_custom_call.1} parent=1 // pred_check_branch
      %19 = sbr.rel (0) target = $region9
    $region8: #{tpu_custom_call.1} parent=1 // pred_region
      _
    $region9: #{tpu_custom_call.1} parent=1 // pred_fallthru
      _
    // Predicated region
    $region10: #{tpu_custom_call.1} parent=1 // pred_check
      _
    $region11: #{tpu_custom_call.1} parent=1 // pred_check_branch
      %21 = sbr.rel (0) target = $region13
    $region12: #{tpu_custom_call.1} parent=1 // pred_region
      _
    $region13: #{tpu_custom_call.1} parent=1 // pred_fallthru
      _
    // Predicated region
    $region14: #{tpu_custom_call.1} parent=1 // pred_check
      _
    $region15: #{tpu_custom_call.1} parent=1 // pred_check_branch
      %23 = sbr.rel (0) target = $region17
    $region16: #{tpu_custom_call.1} parent=1 // pred_region
      _
    $region17: #{tpu_custom_call.1} parent=1 // pred_fallthru
      _
    // Predicated region
    $region18: #{tpu_custom_call.1} parent=1 // pred_check
      _
    $region19: #{tpu_custom_call.1} parent=1 // pred_check_branch
      %25 = sbr.rel (0) target = $region21
    $region20: #{tpu_custom_call.1} parent=1 // pred_region
      _
    $region21: #{tpu_custom_call.1} parent=1 // pred_fallthru
      _
    // Predicated region
    $region22: #{tpu_custom_call.1} parent=1 // pred_check
      _
    $region23: #{tpu_custom_call.1} parent=1 // pred_check_branch
      %27 = sbr.rel (0) target = $region25
    $region24: #{tpu_custom_call.1} parent=1 // pred_region
      _
    $region25: #{tpu_custom_call.1} parent=1 // pred_fallthru
      _
    // Predicated region
    $region26: #{tpu_custom_call.1} parent=1 // pred_check
      _
    $region27: #{tpu_custom_call.1} parent=1 // pred_check_branch
      %29 = sbr.rel (0) target = $region29
    $region28: #{tpu_custom_call.1} parent=1 // pred_region
      _
    $region29: #{tpu_custom_call.1} parent=1 // pred_fallthru
      _
    %v31 = vld [vmem:[%s0] sm:$0xff]
    %v32 = vpack.c.bf16 %v31, %v31
    %v33 = vld [vmem:[%s1] sm:$0xf]
    %v34 = vld [vmem:[%s1 + $0x4] sm:$0xf]
    %v35 = vld [vmem:[%s1 + $0x8] sm:$0xf]
    %v36 = vld [vmem:[%s1 + $0xc] sm:$0xf]
    %v37 = vld [vmem:[%s2] sm:$0x1]
    %v39 = vperm.slane %v37, 0
    %v45 = vunpack.c.l.b16 %v33
    %v46 = vunpack.c.l.b16 %v34
    %v47 = vunpack.c.l.b16 %v35
    %v48 = vunpack.c.l.b16 %v36
    %v49 = vpack.c.b16 %v46, %v45
    %v50 = vpack.c.b16 %v48, %v47
    %vm53 = vcmask 261120
    %v55 = vsel %vm53, %v32, 0
    %57 = vmatpush.bf16.msra.mxu0 0
    %58 = vmatpush.bf16.msra.mxu0 0
    %59 = vmatpush.bf16.msra.mxu0 0
    %60 = vmatpush.bf16.msra.mxu0 0
    %61 = vmatpush.bf16.msra.mxu0 0
    %62 = vmatpush.bf16.msra.mxu0 0
    %63 = vmatpush.bf16.msra.mxu0 %v50
    %64 = vmatpush.bf16.msra.mxu0 %v49
    %65 = vmatmul.bf16.gmra.mxu0 %v55
    %v66 = vpop.f32.mrf.mxu0
    %v67 = vadd.f32 %v39, %v66
    %v68 = vpop.f32.mrf.mxu0
    %69 = vdwg.mxu0
    %v70 = vmax.f32 %v67, 0.0
    %v71 = vpack.c.bf16 %v70, %v70
    %v72 = vld [vmem:[%s3] sm:$0xf]
    %v73 = vld [vmem:[%s3 + $0x4] sm:$0xf]
    %v74 = vld [vmem:[%s3 + $0x8] sm:$0xf]
    %v75 = vld [vmem:[%s3 + $0xc] sm:$0xf]
    %v76 = vld [vmem:[%s3 + $0x10] sm:$0xf]
    %v77 = vld [vmem:[%s3 + $0x14] sm:$0xf]
    %v78 = vld [vmem:[%s3 + $0x18] sm:$0xf]
    %v79 = vld [vmem:[%s3 + $0x1c] sm:$0xf]
    %v80 = vld [vmem:[%s3 + $0x20] sm:$0xf]
    %v81 = vld [vmem:[%s3 + $0x24] sm:$0xf]
    %v82 = vld [vmem:[%s3 + $0x28] sm:$0xf]
    %v83 = vld [vmem:[%s3 + $0x2c] sm:$0xf]
    %v84 = vld [vmem:[%s3 + $0x30] sm:$0xf]
    %v85 = vld [vmem:[%s3 + $0x34] sm:$0xf]
    %v86 = vld [vmem:[%s3 + $0x38] sm:$0xf]
    %v87 = vld [vmem:[%s3 + $0x3c] sm:$0xf]
    %v88 = vld [vmem:[%s4] sm:$0x1]
    %v90 = vperm.slane %v88, 0
    %v108 = vunpack.c.l.b16 %v72
    %v109 = vunpack.c.l.b16 %v73
    %v110 = vunpack.c.l.b16 %v74
    %v111 = vunpack.c.l.b16 %v75
    %v112 = vunpack.c.l.b16 %v76
    %v113 = vunpack.c.l.b16 %v77
    %v114 = vunpack.c.l.b16 %v78
    %v115 = vunpack.c.l.b16 %v79
    %v116 = vunpack.c.l.b16 %v80
    %v117 = vunpack.c.l.b16 %v81
    %v118 = vunpack.c.l.b16 %v82
    %v119 = vunpack.c.l.b16 %v83
    %v120 = vunpack.c.l.b16 %v84
    %v121 = vunpack.c.l.b16 %v85
    %v122 = vunpack.c.l.b16 %v86
    %v123 = vunpack.c.l.b16 %v87
    %v124 = vpack.c.b16 %v109, %v108
    %v125 = vpack.c.b16 %v111, %v110
    %v126 = vpack.c.b16 %v113, %v112
    %v127 = vpack.c.b16 %v115, %v114
    %v128 = vpack.c.b16 %v117, %v116
    %v129 = vpack.c.b16 %v119, %v118
    %v130 = vpack.c.b16 %v121, %v120
    %v131 = vpack.c.b16 %v123, %v122
    %140 = vmatpush.bf16.msra.mxu0 %v131
    %141 = vmatpush.bf16.msra.mxu0 %v130
    %142 = vmatpush.bf16.msra.mxu0 %v129
    %143 = vmatpush.bf16.msra.mxu0 %v128
    %144 = vmatpush.bf16.msra.mxu0 %v127
    %145 = vmatpush.bf16.msra.mxu0 %v126
    %146 = vmatpush.bf16.msra.mxu0 %v125
    %147 = vmatpush.bf16.msra.mxu0 %v124
    %148 = vmatmul.bf16.gmra.mxu0 %v71
    %v149 = vpop.f32.mrf.mxu0
    %v150 = vadd.f32 %v90, %v149
    %v151 = vpop.f32.mrf.mxu0
    %152 = vdwg.mxu0
    %vm153 = vcmask 130048
    %154 = vst.msk [vmem:[#allocation2] sm:$0xff] %vm153, %v150
    %v155 = vld [vmem:[%s5] sm:$0xf]
    %v156 = vld [vmem:[%s5 + $0x4] sm:$0xf]
    %v157 = vld [vmem:[%s5 + $0x8] sm:$0xf]
    %v158 = vld [vmem:[%s5 + $0xc] sm:$0xf]
    %v159 = vld [vmem:[%s5 + $0x10] sm:$0xf]
    %v160 = vld [vmem:[%s5 + $0x14] sm:$0xf]
    %v161 = vld [vmem:[%s5 + $0x18] sm:$0xf]
    %v162 = vld [vmem:[%s5 + $0x1c] sm:$0xf]
    %v163 = vld [vmem:[%s5 + $0x20] sm:$0xf]
    %v164 = vld [vmem:[%s5 + $0x24] sm:$0xf]
    %v165 = vld [vmem:[%s5 + $0x28] sm:$0xf]
    %v166 = vld [vmem:[%s5 + $0x2c] sm:$0xf]
    %v167 = vld [vmem:[%s5 + $0x30] sm:$0xf]
    %v168 = vld [vmem:[%s5 + $0x34] sm:$0xf]
    %v169 = vld [vmem:[%s5 + $0x38] sm:$0xf]
    %v170 = vld [vmem:[%s5 + $0x3c] sm:$0xf]
    %v171 = vld [vmem:[%s6] sm:$0x1]
    %v173 = vperm.slane %v171, 0
    %v191 = vunpack.c.l.b16 %v155
    %v192 = vunpack.c.l.b16 %v156
    %v193 = vunpack.c.l.b16 %v157
    %v194 = vunpack.c.l.b16 %v158
    %v195 = vunpack.c.l.b16 %v159
    %v196 = vunpack.c.l.b16 %v160
    %v197 = vunpack.c.l.b16 %v161
    %v198 = vunpack.c.l.b16 %v162
    %v199 = vunpack.c.l.b16 %v163
    %v200 = vunpack.c.l.b16 %v164
    %v201 = vunpack.c.l.b16 %v165
    %v202 = vunpack.c.l.b16 %v166
    %v203 = vunpack.c.l.b16 %v167
    %v204 = vunpack.c.l.b16 %v168
    %v205 = vunpack.c.l.b16 %v169
    %v206 = vunpack.c.l.b16 %v170
    %v207 = vpack.c.b16 %v192, %v191
    %v208 = vpack.c.b16 %v194, %v193
    %v209 = vpack.c.b16 %v196, %v195
    %v210 = vpack.c.b16 %v198, %v197
    %v211 = vpack.c.b16 %v200, %v199
    %v212 = vpack.c.b16 %v202, %v201
    %v213 = vpack.c.b16 %v204, %v203
    %v214 = vpack.c.b16 %v206, %v205
    %223 = vmatpush.bf16.msra.mxu0 %v214
    %224 = vmatpush.bf16.msra.mxu0 %v213
    %225 = vmatpush.bf16.msra.mxu0 %v212
    %226 = vmatpush.bf16.msra.mxu0 %v211
    %227 = vmatpush.bf16.msra.mxu0 %v210
    %228 = vmatpush.bf16.msra.mxu0 %v209
    %229 = vmatpush.bf16.msra.mxu0 %v208
    %230 = vmatpush.bf16.msra.mxu0 %v207
    %231 = vmatmul.bf16.gmra.mxu0 %v71
    %v232 = vpop.f32.mrf.mxu0
    %v233 = vadd.f32 %v173, %v232
    %v234 = vpop.f32.mrf.mxu0
    %235 = vdwg.mxu0
    %vm236 = vcmask 64512
    %237 = vst.msk [vmem:[#allocation4] sm:$0xff] %vm236, %v233
    // Predicated region
    $region30: #{tpu_custom_call.1} parent=1 // pred_check
      _
    $region31: #{tpu_custom_call.1} parent=1 // pred_check_branch
      %239 = sbr.rel (0) target = $region33
    $region32: #{tpu_custom_call.1} parent=1 // pred_region
      %241 = vsyncadd [#allocation3], 0
      %s243 = sshll.u32 [#allocation2], 4
      %s244 = int_to_ptr.vmem [resolvable:$true] %s243
      %s245 = sshll.u32 %s7, 4
      %s246 = int_to_ptr.hbm [resolvable:$true] %s245
      %248 = dma.vmem_to_hbm [thread:$0]  %s244, 128, %s246, [#allocation3]
    $region33: #{tpu_custom_call.1} parent=1 // pred_fallthru
      _
    // Predicated region
    $region34: #{tpu_custom_call.1} parent=1 // pred_check
      _
    $region35: #{tpu_custom_call.1} parent=1 // pred_check_branch
      %250 = sbr.rel (0) target = $region37
    $region36: #{tpu_custom_call.1} parent=1 // pred_region
      %252 = vsyncadd [#allocation5], 0
      %s254 = sshll.u32 [#allocation4], 4
      %s255 = int_to_ptr.vmem [resolvable:$true] %s254
      %s256 = sshll.u32 %s8, 4
      %s257 = int_to_ptr.hbm [resolvable:$true] %s256
      %259 = dma.vmem_to_hbm [thread:$0]  %s255, 128, %s257, [#allocation5]
    $region37: #{tpu_custom_call.1} parent=1 // pred_fallthru
      _
    // Predicated region
    $region38: #{tpu_custom_call.1} parent=1 // pred_check
      _
    $region39: #{tpu_custom_call.1} parent=1 // pred_check_branch
      %261 = sbr.rel (0) target = $region41
    $region40: #{tpu_custom_call.1} parent=1 // pred_region
      %263 = dma.done [#allocation3], 128
    $region41: #{tpu_custom_call.1} parent=1 // pred_fallthru
      _
    // Predicated region
    $region42: #{tpu_custom_call.1} parent=1 // pred_check
      _
    $region43: #{tpu_custom_call.1} parent=1 // pred_check_branch
      %265 = sbr.rel (0) target = $region45
    $region44: #{tpu_custom_call.1} parent=1 // pred_region
      %267 = dma.done [#allocation5], 128
    $region45: #{tpu_custom_call.1} parent=1 // pred_fallthru
      _
    %268 = vsyncpa [#allocation3], 1
    %269 = vsyncpa [#allocation5], 1

</llo_original>
